<compile_context>
chip_gen: v7x
topology: tpu7x:2x2x1
jax: 0.10.0
libtpu: 0.0.40
codegen_flags: <defaults>
</compile_context>

<pallas_src>
import math

import jax
import jax.numpy as jnp
from jax.experimental import pallas as pl
from jax.experimental.pallas import tpu as pltpu


def _get_pad_shape(input_h, input_w, kernel_size, stride, dilation):
    """Exact port of AdaptivePadding.get_pad_shape (all static Python ints)."""
    kernel_h, kernel_w = kernel_size
    stride_h, stride_w = stride
    dil_h, dil_w = dilation
    output_h = math.ceil(input_h / stride_h)
    output_w = math.ceil(input_w / stride_w)
    pad_h = max((output_h - 1) * stride_h + (kernel_h - 1) * dil_h + 1 - input_h, 0)
    pad_w = max((output_w - 1) * stride_w + (kernel_w - 1) * dil_w + 1 - input_w, 0)
    return pad_h, pad_w


def _choose_tile(n, per_item_bytes, target_bytes=4 * 1024 * 1024):
    """Largest divisor of n whose per-block (in+out) footprint <= target_bytes."""
    t_max = max(1, min(n, target_bytes // max(per_item_bytes, 1)))
    for d in range(int(t_max), 0, -1):
        if n % d == 0:
            return d
    return 1


def _make_pad_kernel(top, left, bottom, right, in_h, in_w, out_h, out_w):
    """Kernel over one (Ct, H, W) -> (Ct, H_out, W_out) channel-chunk block."""

    def pad_kernel(x_ref, o_ref):
        ct = o_ref.shape[0]
        dt = o_ref.dtype

        # Single interior store (no full-tile zero followed by an overwrite).
        o_ref[:, pl.ds(top, in_h), pl.ds(left, in_w)] = x_ref[...]

        # Zero only the padding strips (all pad geometry is compile-time
        # constant -> static Python conditionals, static slices).
        if top > 0:
            o_ref[:, pl.ds(0, top), :] = jnp.zeros((ct, top, out_w), dt)
        if bottom > 0:
            o_ref[:, pl.ds(top + in_h, bottom), :] = jnp.zeros((ct, bottom, out_w), dt)
        if left > 0:
            o_ref[:, pl.ds(top, in_h), pl.ds(0, left)] = jnp.zeros((ct, in_h, left), dt)
        if right > 0:
            o_ref[:, pl.ds(top, in_h), pl.ds(left + in_w, right)] = (
                jnp.zeros((ct, in_h, right), dt))

    return pad_kernel


def adaptive_padding(x, kernel_size=1, stride=1, dilation=1, padding='corner'):
    """Functional equivalent of AdaptivePadding.forward on an NCHW tensor."""
    assert padding in ('same', 'corner')
    ks = (kernel_size, kernel_size)
    st = (stride, stride)
    dl = (dilation, dilation)

    b, c, h, w = x.shape
    pad_h, pad_w = _get_pad_shape(h, w, ks, st, dl)

    if pad_h == 0 and pad_w == 0:
        return x  # no-pad fast path (values identical, no copy needed)

    if padding == 'corner':
        top, left = 0, 0
    else:  # 'same'
        top, left = pad_h // 2, pad_w // 2
    bottom = pad_h - top
    right = pad_w - left

    out_h, out_w = h + pad_h, w + pad_w

    # Fold batch & channel into one axis (free, contiguous reshape) so the
    # tile chooser sees all of B*C and the grid is 1-D.
    n = b * c
    x_flat = x.reshape(n, h, w)

    itemsize = jnp.dtype(x.dtype).itemsize
    per_item_bytes = (h * w + out_h * out_w) * itemsize
    ct = _choose_tile(n, per_item_bytes)
    grid = (n // ct,)

    kernel = _make_pad_kernel(top, left, bottom, right, h, w, out_h, out_w)

    in_bytes = n * h * w * itemsize
    out_bytes = n * out_h * out_w * itemsize

    out_flat = pl.pallas_call(
        kernel,
        out_shape=jax.ShapeDtypeStruct((n, out_h, out_w), x.dtype),
        grid_spec=pltpu.PrefetchScalarGridSpec(
            num_scalar_prefetch=0,
            grid=grid,
            in_specs=[pl.BlockSpec((ct, h, w), lambda i: (i, 0, 0))],
            out_specs=pl.BlockSpec((ct, out_h, out_w), lambda i: (i, 0, 0)),
        ),
        compiler_params=pltpu.CompilerParams(
            dimension_semantics=("parallel",),
            vmem_limit_bytes=32 * 1024 * 1024,
        ),
        cost_estimate=pl.CostEstimate(
            flops=0, transcendentals=0, bytes_accessed=in_bytes + out_bytes),
    )(x_flat)

    return out_flat.reshape(b, c, out_h, out_w)


def _reference(x, kernel_size, stride, dilation, padding):
    """Pure-JAX reference (mirrors F.pad semantics of the PyTorch module)."""
    ks = (kernel_size, kernel_size)
    st = (stride, stride)
    dl = (dilation, dilation)
    _, _, h, w = x.shape
    pad_h, pad_w = _get_pad_shape(h, w, ks, st, dl)
    if pad_h == 0 and pad_w == 0:
        return x
    if padding == 'corner':
        pads = ((0, 0), (0, 0), (0, pad_h), (0, pad_w))
    else:
        pads = ((0, 0), (0, 0),
                (pad_h // 2, pad_h - pad_h // 2),
                (pad_w // 2, pad_w - pad_w // 2))
    return jnp.pad(x, pads)


if __name__ == "__main__":
    key = jax.random.PRNGKey(0)
    ok = True

    # 1) Docstring example shapes: 15x17 patchified by 16 -> padded to (16, 32).
    B, C, H, W = 2, 4, 15, 17
    x = jax.random.normal(key, (B, C, H, W), dtype=jnp.float32)
    for mode in ("corner", "same"):
        out = jax.block_until_ready(
            adaptive_padding(x, kernel_size=16, stride=16, dilation=1, padding=mode))
        ref = _reference(x, 16, 16, 1, mode)
        if out.shape != (B, C, 16, 32) or not jnp.allclose(out, ref):
            ok = False

    # 2) No-pad fast path (H, W already divisible).
    x2 = jax.random.normal(key, (B, C, 16, 32), dtype=jnp.float32)
    out2 = jax.block_until_ready(
        adaptive_padding(x2, kernel_size=16, stride=16, dilation=1, padding="corner"))
    if out2.shape != (B, C, 16, 32) or not jnp.allclose(out2, x2):
        ok = False

    # 3) 'same' mode with symmetric pads (kernel 7, stride 4 on 13x13 -> 19x19).
    x3 = jax.random.normal(key, (2, 4, 13, 13), dtype=jnp.float32)
    out3 = jax.block_until_ready(
        adaptive_padding(x3, kernel_size=7, stride=4, dilation=1, padding="same"))
    ref3 = _reference(x3, 7, 4, 1, "same")
    if out3.shape != ref3.shape or not jnp.allclose(out3, ref3):
        ok = False

    # 4) bf16 input stays in native dtype end-to-end.
    x4 = jax.random.normal(key, (B, C, H, W), dtype=jnp.bfloat16)
    out4 = jax.block_until_ready(
        adaptive_padding(x4, kernel_size=16, stride=16, dilation=1, padding="corner"))
    ref4 = _reference(x4, 16, 16, 1, "corner")
    if out4.dtype != jnp.bfloat16 or not jnp.array_equal(out4, ref4):
        ok = False

    # 5) Odd channel count (C=3) exercises the B*C-folded tile chooser.
    x5 = jax.random.normal(key, (2, 3, 15, 17), dtype=jnp.float32)
    out5 = jax.block_until_ready(
        adaptive_padding(x5, kernel_size=16, stride=16, dilation=1, padding="corner"))
    ref5 = _reference(x5, 16, 16, 1, "corner")
    if out5.shape != ref5.shape or not jnp.allclose(out5, ref5):
        ok = False

    if ok:
        print("KERNEL_OK")
</pallas_src>

<mosaic_0001>
module attributes {stable_mosaic.version = 11 : i64} {
  func.func @pad_kernel(%arg0: i32, %arg1: memref<8x15x17xf32, #tpu.memory_space<vmem>>, %arg2: memref<8x16x32xf32, #tpu.memory_space<vmem>>) attributes {dimension_semantics = [#tpu.dimension_semantics<parallel>], iteration_bounds = array<i64: 1>, scalar_prefetch = 0 : i64, scratch_operands = 0 : i64, tpu.core_type = #tpu.core_type<tc>, window_params = [{transform_indices = @transform_0, window_bounds = array<i64: 8, 15, 17>}, {transform_indices = @transform_1, window_bounds = array<i64: 8, 16, 32>}]} {
    %c0 = arith.constant 0 : index
    %c0_0 = arith.constant 0 : index
    %c0_1 = arith.constant 0 : index
    %0 = vector.load %arg1[%c0, %c0_0, %c0_1] : memref<8x15x17xf32, #tpu.memory_space<vmem>>, vector<8x15x17xf32>
    %c0_2 = arith.constant 0 : index
    %c0_3 = arith.constant 0 : index
    %c0_4 = arith.constant 0 : index
    %1 = vector.load %arg2[%c0_2, %c0_3, %c0_4] : memref<8x16x32xf32, #tpu.memory_space<vmem>>, vector<8x15x17xf32>
    tpu.vector_store %arg2[%c0_2, %c0_3, %c0_4], %0 {strides = array<i32>} : memref<8x16x32xf32, #tpu.memory_space<vmem>>, vector<8x15x17xf32>,
    %cst = arith.constant 0.000000e+00 : f32
    %2 = vector.broadcast %cst : f32 to vector<8x1x32xf32>
    %c0_5 = arith.constant 0 : index
    %c15 = arith.constant 15 : index
    %c0_6 = arith.constant 0 : index
    %3 = vector.load %arg2[%c0_5, %c15, %c0_6] : memref<8x16x32xf32, #tpu.memory_space<vmem>>, vector<8x1x32xf32>
    tpu.vector_store %arg2[%c0_5, %c15, %c0_6], %2 {strides = array<i32>} : memref<8x16x32xf32, #tpu.memory_space<vmem>>, vector<8x1x32xf32>,
    %cst_7 = arith.constant 0.000000e+00 : f32
    %4 = vector.broadcast %cst_7 : f32 to vector<8x15x15xf32>
    %c0_8 = arith.constant 0 : index
    %c0_9 = arith.constant 0 : index
    %c17 = arith.constant 17 : index
    %5 = vector.load %arg2[%c0_8, %c0_9, %c17] : memref<8x16x32xf32, #tpu.memory_space<vmem>>, vector<8x15x15xf32>
    tpu.vector_store %arg2[%c0_8, %c0_9, %c17], %4 {strides = array<i32>} : memref<8x16x32xf32, #tpu.memory_space<vmem>>, vector<8x15x15xf32>,
    return
  }
  func.func @transform_0(%arg0: i32) -> (i32, i32, i32) {
    %c0_i32 = arith.constant 0 : i32
    %c0_i32_0 = arith.constant 0 : i32
    %c0_i32_1 = arith.constant 0 : i32
    return %arg0, %c0_i32, %c0_i32_0 : i32, i32, i32
  }
  func.func @transform_1(%arg0: i32) -> (i32, i32, i32) {
    %c0_i32 = arith.constant 0 : i32
    %c0_i32_0 = arith.constant 0 : i32
    %c0_i32_1 = arith.constant 0 : i32
    return %arg0, %c0_i32, %c0_i32_0 : i32, i32, i32
  }
}

</mosaic_0001>

<llo_original>
// kernel: tpu_custom_call.1
$region0: #{tpu_custom_call.1}
  #allocation0 [shape = 'u32[]', space=smem, size = 0x4, offset = 0x4, fixed_abs, tag = 'smem constant byte address 0x4 - core index']
  #allocation1 [shape = 'u32[144,128]{1,0:T(1,128)}', space=vmem, size = 0x12000, scoped, tag = 'internal scratch']
  %s0 = inlined_call_operand.vmem [shape: f32[8,15,17], index: 0, kind: input, shape index: {}]
  %s1 = inlined_call_operand.hbm [shape: f32[8,16,32], index: 1, kind: output, shape index: {}]
  %s2 = sld [smem:[#allocation0]]
  $region14: #{tpu_custom_call.1} parent=0
    _
  %s4 = ssub.s32 1, %s2
  %s5 = scalar_select 0, %s4, %s2
  $region1: #{tpu_custom_call.1} parent=0
    #allocation2 [shape = 'u8[65536]{0}', space=vmem, size = 0x10000, scoped, tag = 'output window, operand 0, single buffered']
    #allocation3 [shape = 's32[1]{0}', space=sflag, size = 0x4, scoped, tag = 'scoped memory for tpu_custom_call.1']
    %6 = vsyncpa [#allocation3], 0
    // Predicated region
    $region2: #{tpu_custom_call.1} parent=1 // pred_check
      _
    $region3: #{tpu_custom_call.1} parent=1 // pred_check_branch
      %8 = sbr.rel (0) target = $region5
    $region4: #{tpu_custom_call.1} parent=1 // pred_region
      _
    $region5: #{tpu_custom_call.1} parent=1 // pred_fallthru
      _
    %v9 = vld [vmem:[%s0] sm:$0xff]
    %v10 = vld [vmem:[%s0 + $0x8] sm:$0x7f]
    %v11 = vld [vmem:[%s0 + $0x10] sm:$0xff]
    %v12 = vld [vmem:[%s0 + $0x18] sm:$0x7f]
    %v13 = vld [vmem:[%s0 + $0x20] sm:$0xff]
    %v14 = vld [vmem:[%s0 + $0x28] sm:$0x7f]
    %v15 = vld [vmem:[%s0 + $0x30] sm:$0xff]
    %v16 = vld [vmem:[%s0 + $0x38] sm:$0x7f]
    %v17 = vld [vmem:[%s0 + $0x40] sm:$0xff]
    %v18 = vld [vmem:[%s0 + $0x48] sm:$0x7f]
    %v19 = vld [vmem:[%s0 + $0x50] sm:$0xff]
    %v20 = vld [vmem:[%s0 + $0x58] sm:$0x7f]
    %v21 = vld [vmem:[%s0 + $0x60] sm:$0xff]
    %v22 = vld [vmem:[%s0 + $0x68] sm:$0x7f]
    %v23 = vld [vmem:[%s0 + $0x70] sm:$0xff]
    %v24 = vld [vmem:[%s0 + $0x78] sm:$0x7f]
    %vm25 = vcmask 138240
    %26 = vst.msk [vmem:[#allocation2] sm:$0xff] %vm25, %v9
    %vm27 = vcmask 137216
    %28 = vst.msk [vmem:[#allocation2 + $0x8] sm:$0x7f] %vm27, %v10
    %29 = vst.msk [vmem:[#allocation2 + $0x10] sm:$0xff] %vm25, %v11
    %30 = vst.msk [vmem:[#allocation2 + $0x18] sm:$0x7f] %vm27, %v12
    %31 = vst.msk [vmem:[#allocation2 + $0x20] sm:$0xff] %vm25, %v13
    %32 = vst.msk [vmem:[#allocation2 + $0x28] sm:$0x7f] %vm27, %v14
    %33 = vst.msk [vmem:[#allocation2 + $0x30] sm:$0xff] %vm25, %v15
    %34 = vst.msk [vmem:[#allocation2 + $0x38] sm:$0x7f] %vm27, %v16
    %35 = vst.msk [vmem:[#allocation2 + $0x40] sm:$0xff] %vm25, %v17
    %36 = vst.msk [vmem:[#allocation2 + $0x48] sm:$0x7f] %vm27, %v18
    %37 = vst.msk [vmem:[#allocation2 + $0x50] sm:$0xff] %vm25, %v19
    %38 = vst.msk [vmem:[#allocation2 + $0x58] sm:$0x7f] %vm27, %v20
    %39 = vst.msk [vmem:[#allocation2 + $0x60] sm:$0xff] %vm25, %v21
    %40 = vst.msk [vmem:[#allocation2 + $0x68] sm:$0x7f] %vm27, %v22
    %41 = vst.msk [vmem:[#allocation2 + $0x70] sm:$0xff] %vm25, %v23
    %42 = vst.msk [vmem:[#allocation2 + $0x78] sm:$0x7f] %vm27, %v24
    %vm43 = vcmask 253952
    %44 = vst.msk [vmem:[#allocation2 + $0xf] sm:$0x1] %vm43, 0.0
    %45 = vst.msk [vmem:[#allocation2 + $0x1f] sm:$0x1] %vm43, 0.0
    %46 = vst.msk [vmem:[#allocation2 + $0x2f] sm:$0x1] %vm43, 0.0
    %47 = vst.msk [vmem:[#allocation2 + $0x3f] sm:$0x1] %vm43, 0.0
    %48 = vst.msk [vmem:[#allocation2 + $0x4f] sm:$0x1] %vm43, 0.0
    %49 = vst.msk [vmem:[#allocation2 + $0x5f] sm:$0x1] %vm43, 0.0
    %50 = vst.msk [vmem:[#allocation2 + $0x6f] sm:$0x1] %vm43, 0.0
    %51 = vst.msk [vmem:[#allocation2 + $0x7f] sm:$0x1] %vm43, 0.0
    %vm52 = vcmask 261256
    %53 = vst.msk [vmem:[#allocation2] sm:$0xff] %vm52, 0.0
    %vm54 = vcmask 260232
    %55 = vst.msk [vmem:[#allocation2 + $0x8] sm:$0x7f] %vm54, 0.0
    %56 = vst.msk [vmem:[#allocation2 + $0x10] sm:$0xff] %vm52, 0.0
    %57 = vst.msk [vmem:[#allocation2 + $0x18] sm:$0x7f] %vm54, 0.0
    %58 = vst.msk [vmem:[#allocation2 + $0x20] sm:$0xff] %vm52, 0.0
    %59 = vst.msk [vmem:[#allocation2 + $0x28] sm:$0x7f] %vm54, 0.0
    %60 = vst.msk [vmem:[#allocation2 + $0x30] sm:$0xff] %vm52, 0.0
    %61 = vst.msk [vmem:[#allocation2 + $0x38] sm:$0x7f] %vm54, 0.0
    %62 = vst.msk [vmem:[#allocation2 + $0x40] sm:$0xff] %vm52, 0.0
    %63 = vst.msk [vmem:[#allocation2 + $0x48] sm:$0x7f] %vm54, 0.0
    %64 = vst.msk [vmem:[#allocation2 + $0x50] sm:$0xff] %vm52, 0.0
    %65 = vst.msk [vmem:[#allocation2 + $0x58] sm:$0x7f] %vm54, 0.0
    %66 = vst.msk [vmem:[#allocation2 + $0x60] sm:$0xff] %vm52, 0.0
    %67 = vst.msk [vmem:[#allocation2 + $0x68] sm:$0x7f] %vm54, 0.0
    %68 = vst.msk [vmem:[#allocation2 + $0x70] sm:$0xff] %vm52, 0.0
    %69 = vst.msk [vmem:[#allocation2 + $0x78] sm:$0x7f] %vm54, 0.0
    // Predicated region
    $region6: #{tpu_custom_call.1} parent=1 // pred_check
      _
    $region7: #{tpu_custom_call.1} parent=1 // pred_check_branch
      %71 = sbr.rel (0) target = $region9
    $region8: #{tpu_custom_call.1} parent=1 // pred_region
      %s73 = ssub.s32 2048, 2048
      %74 = vsyncadd [#allocation3], %s73
      %s75 = sshll.u32 [#allocation2], 4
      %s76 = int_to_ptr.vmem [resolvable:$true] %s75
      %81 = dma.vmem_to_hbm [thread:$0]  %s76, 2048, %s1, [#allocation3], 128, 128, 8
    $region9: #{tpu_custom_call.1} parent=1 // pred_fallthru
      _
    // Predicated region
    $region10: #{tpu_custom_call.1} parent=1 // pred_check
      _
    $region11: #{tpu_custom_call.1} parent=1 // pred_check_branch
      %83 = sbr.rel (0) target = $region13
    $region12: #{tpu_custom_call.1} parent=1 // pred_region
      %84 = dma.done [#allocation3], 2048
    $region13: #{tpu_custom_call.1} parent=1 // pred_fallthru
      _
    %85 = vsyncpa [#allocation3], 1

</llo_original>
